<compile_context>
chip_gen: v6e
topology: v6e:2x2x1
jax: 0.10.0
libtpu: 0.0.40
codegen_flags: <defaults>
</compile_context>

<pallas_src>
import jax
import jax.numpy as jnp
import numpy as np
from jax import lax
from jax.experimental import pallas as pl
from jax.experimental.pallas import tpu as pltpu

N_BITS = 8
N_LEVELS = 2 ** N_BITS          # asymmetric (sym=False) -> 256 levels
QMAX = float(N_LEVELS - 1)      # 255.0
LANE = 128                      # TPU lane width


def quant_conv_kernel(inv_da_ref, za_ref, x_ref, qw_ref, scale_ref, b_ref, o_ref):
    """Activation fake-quant (integer domain) + bf16 MXU matmul + rescale.

    x_ref     : (TM, K)        f32  im2col patch tile
    qw_ref    : (K, COUT_PAD)  bf16 pre-quantized, zero-point-centered weights
    scale_ref : (1, COUT_PAD)  f32  delta_a * delta_w per output column
    b_ref     : (1, COUT_PAD)  f32  bias per output column (0 in padding)
    """
    inv_da = inv_da_ref[0]          # scalar: 1 / delta_a
    za = za_ref[0]                  # scalar: activation zero point

    # clip(round(x/da) + za, 0, 255) - za  ==  clip(round(x*inv_da), -za, 255-za)
    x_q = jnp.clip(jnp.round(x_ref[...] * inv_da), -za, QMAX - za)

    # Integer values in [-255, 255] are exact in bf16 -> bf16 MXU path, exact
    # integer accumulation in the f32 accumulator.
    acc = jnp.dot(x_q.astype(jnp.bfloat16), qw_ref[...],
                  preferred_element_type=jnp.float32)

    # Per-output-channel dequant rescale + bias; lane-dense (TM, 128) store.
    o_ref[...] = acc * scale_ref[...] + b_ref[...]


def quant_module_forward(x_nchw, weight_oihw, bias, stride=1, padding=1, tm=256):
    N, Cin, H, W = x_nchw.shape
    Cout, _, KH, KW = weight_oihw.shape
    OH = (H + 2 * padding - KH) // stride + 1
    OW = (W + 2 * padding - KW) // stride + 1
    K = Cin * KH * KW
    M = N * OH * OW

    # ---- quantizer init (one-time setup -> plain JAX glue) -----------------
    # UniformAffineQuantizer('max', sym=False, always_zero=False):
    #   delta = (x.max() - x.min()) / (n_levels - 1)   (raw, unclamped range)
    #   zero_point = round(-min(x.min(), 0) / delta)
    # activation quantizer (channel_wise=False, tensor-wise):
    x_max = x_nchw.max()
    x_min = x_nchw.min()
    delta_a = jnp.maximum((x_max - x_min) / (N_LEVELS - 1), 1e-8)
    zp_a = jnp.round(-jnp.minimum(x_min, 0.0) / delta_a)
    inv_delta_a = 1.0 / delta_a

    # weight quantizer (channel_wise=True -> per output channel):
    w_flat = weight_oihw.reshape(Cout, -1)              # (Cout, K), OIHW order
    delta_w = jnp.maximum(
        (w_flat.max(axis=1) - w_flat.min(axis=1)) / (N_LEVELS - 1), 1e-8)
    zp_w = jnp.round(-jnp.minimum(w_flat.min(axis=1), 0.0) / delta_w)

    # Hoisted weight fake-quant (done once, not per grid step): exact integers
    # in [-255, 255], zero-point-centered, cast to bf16 for the MXU.
    w_q = jnp.clip(jnp.round(w_flat / delta_w[:, None]) + zp_w[:, None], 0.0, QMAX)
    qw_centered = w_q - zp_w[:, None]                   # (Cout, K)

    # ---- lane-dense / tile padding -----------------------------------------
    Cout_pad = pl.cdiv(Cout, LANE) * LANE
    M_pad = pl.cdiv(M, tm) * tm

    qw_mat = jnp.zeros((K, Cout_pad), jnp.bfloat16).at[:, :Cout].set(
        qw_centered.T.astype(jnp.bfloat16))
    col_scale = jnp.zeros((1, Cout_pad), jnp.float32).at[0, :Cout].set(
        delta_a * delta_w)
    bias_pad = jnp.zeros((1, Cout_pad), jnp.float32).at[0, :Cout].set(bias)

    # ---- im2col (layout glue; matches OIHW flatten order) ------------------
    xp = jnp.pad(x_nchw, ((0, 0), (0, 0), (padding, padding), (padding, padding)))
    cols = []
    for i in range(KH):
        for j in range(KW):
            cols.append(xp[:, :, i:i + stride * OH:stride, j:j + stride * OW:stride])
    p = jnp.stack(cols, axis=2).reshape(N, K, OH, OW)   # Cin slowest, then KH,KW
    patches = p.transpose(0, 2, 3, 1).reshape(M, K)
    if M_pad != M:
        # zero rows quantize exactly to 0 (clip(round(0)+za)-za == 0); sliced off.
        patches = jnp.pad(patches, ((0, M_pad - M), (0, 0)))

    out_mat = pl.pallas_call(
        quant_conv_kernel,
        out_shape=jax.ShapeDtypeStruct((M_pad, Cout_pad), jnp.float32),
        grid=(M_pad // tm,),
        in_specs=[
            pl.BlockSpec(memory_space=pltpu.SMEM),            # inv_delta_a (1,)
            pl.BlockSpec(memory_space=pltpu.SMEM),            # zp_a        (1,)
            pl.BlockSpec((tm, K), lambda m: (m, 0)),          # patches tile
            pl.BlockSpec((K, Cout_pad), lambda m: (0, 0)),    # prequantized W
            pl.BlockSpec((1, Cout_pad), lambda m: (0, 0)),    # per-col scale
            pl.BlockSpec((1, Cout_pad), lambda m: (0, 0)),    # bias
        ],
        out_specs=pl.BlockSpec((tm, Cout_pad), lambda m: (m, 0)),
        compiler_params=pltpu.CompilerParams(
            dimension_semantics=("parallel",),
            vmem_limit_bytes=32 * 1024 * 1024),
    )(
        inv_delta_a.reshape(1), zp_a.reshape(1),
        patches, qw_mat, col_scale, bias_pad,
    )

    # (M_pad, Cout_pad) -> slice padding -> NHWC -> NCHW (PyTorch output layout)
    out = out_mat[:M, :Cout].reshape(N, OH, OW, Cout).transpose(0, 3, 1, 2)
    return out, (delta_a, zp_a, delta_w, zp_w)


def _fake_quant_act_ref(x, delta, zp):
    # mirrors the kernel's reciprocal-multiply form (== x / delta of the module)
    x_int = jnp.round(x * (1.0 / delta)) + zp
    x_q = jnp.clip(x_int, 0.0, QMAX)
    return (x_q - zp) * delta


def _fake_quant_w_ref(w, delta, zp):
    x_int = jnp.round(w / delta) + zp
    x_q = jnp.clip(x_int, 0.0, QMAX)
    return (x_q - zp) * delta


if __name__ == "__main__":
    key = jax.random.PRNGKey(0)
    k1, k2, k3 = jax.random.split(key, 3)

    # org_module: nn.Conv2d(4, 8, kernel_size=3, stride=1, padding=1, bias=True)
    N, Cin, H, W = 2, 4, 16, 16
    Cout, KH, KW = 8, 3, 3
    x = jax.random.normal(k1, (N, Cin, H, W), dtype=jnp.float32)
    weight = jax.random.normal(k2, (Cout, Cin, KH, KW), dtype=jnp.float32) * 0.1
    bias = jax.random.normal(k3, (Cout,), dtype=jnp.float32) * 0.01

    out, (delta_a, zp_a, delta_w, zp_w) = quant_module_forward(x, weight, bias)
    out = jax.block_until_ready(out)

    # pure-JAX reference of the same forward semantics
    x_dq = _fake_quant_act_ref(x, delta_a, zp_a)
    w_dq = _fake_quant_w_ref(
        weight, delta_w[:, None, None, None], zp_w[:, None, None, None])
    ref = lax.conv_general_dilated(
        x_dq, w_dq, window_strides=(1, 1), padding=((1, 1), (1, 1)),
        dimension_numbers=("NCHW", "OIHW", "NCHW")) + bias[None, :, None, None]

    assert out.shape == (N, Cout, H, W)
    assert np.allclose(np.asarray(out), np.asarray(ref), atol=2e-3, rtol=2e-3)
    print("KERNEL_OK")
</pallas_src>

<mosaic_0001>
module attributes {stable_mosaic.version = 11 : i64} {
  func.func @quant_conv_kernel(%arg0: i32, %arg1: memref<1xf32, #tpu.memory_space<smem>>, %arg2: memref<1xf32, #tpu.memory_space<smem>>, %arg3: memref<256x36xf32, #tpu.memory_space<vmem>>, %arg4: memref<36x128xbf16, #tpu.memory_space<vmem>>, %arg5: memref<1x128xf32, #tpu.memory_space<vmem>>, %arg6: memref<1x128xf32, #tpu.memory_space<vmem>>, %arg7: memref<256x128xf32, #tpu.memory_space<vmem>>) attributes {dimension_semantics = [#tpu.dimension_semantics<parallel>], iteration_bounds = array<i64: 2>, scalar_prefetch = 0 : i64, scratch_operands = 0 : i64, tpu.core_type = #tpu.core_type<tc>, window_params = [{transform_indices = @transform_0, window_bounds = array<i64: 1>}, {transform_indices = @transform_1, window_bounds = array<i64: 1>}, {transform_indices = @transform_2, window_bounds = array<i64: 256, 36>}, {pipeline_mode = #tpu.pipeline_mode<synchronous>, transform_indices = @transform_3, window_bounds = array<i64: 36, 128>}, {pipeline_mode = #tpu.pipeline_mode<synchronous>, transform_indices = @transform_4, window_bounds = array<i64: 1, 128>}, {pipeline_mode = #tpu.pipeline_mode<synchronous>, transform_indices = @transform_5, window_bounds = array<i64: 1, 128>}, {transform_indices = @transform_6, window_bounds = array<i64: 256, 128>}]} {
    %c0 = arith.constant 0 : index
    %0 = memref.load %arg1[%c0] : memref<1xf32, #tpu.memory_space<smem>>
    %c0_0 = arith.constant 0 : index
    %1 = memref.load %arg2[%c0_0] : memref<1xf32, #tpu.memory_space<smem>>
    %c0_1 = arith.constant 0 : index
    %c0_2 = arith.constant 0 : index
    %2 = vector.load %arg3[%c0_1, %c0_2] : memref<256x36xf32, #tpu.memory_space<vmem>>, vector<256x36xf32>
    %3 = vector.broadcast %0 : f32 to vector<256x36xf32>
    %4 = arith.mulf %2, %3 : vector<256x36xf32>
    %5 = math.roundeven %4 : vector<256x36xf32>
    %cst = arith.constant 0.000000e+00 : f32
    %6 = arith.subf %cst, %1 : f32
    %cst_3 = arith.constant 2.550000e+02 : f32
    %7 = arith.subf %cst_3, %1 : f32
    %8 = vector.broadcast %6 : f32 to vector<256x36xf32>
    %9 = arith.maximumf %8, %5 : vector<256x36xf32>
    %10 = vector.broadcast %7 : f32 to vector<256x36xf32>
    %11 = arith.minimumf %10, %9 : vector<256x36xf32>
    %12 = arith.truncf %11 : vector<256x36xf32> to vector<256x36xbf16>
    %c0_4 = arith.constant 0 : index
    %c0_5 = arith.constant 0 : index
    %13 = vector.load %arg4[%c0_4, %c0_5] : memref<36x128xbf16, #tpu.memory_space<vmem>>, vector<36x128xbf16>
    %cst_6 = arith.constant dense<0.000000e+00> : vector<256x128xf32>
    %14 = tpu.matmul %12, %13, %cst_6 {dimension_numbers = #tpu.dot_dimension_numbers<[1], [0], [0], [1], [0, 0, 1, 1], [], []>} : vector<256x36xbf16>, vector<36x128xbf16>, vector<256x128xf32> -> vector<256x128xf32>
    %c0_7 = arith.constant 0 : index
    %c0_8 = arith.constant 0 : index
    %15 = vector.load %arg5[%c0_7, %c0_8] : memref<1x128xf32, #tpu.memory_space<vmem>>, vector<1x128xf32>
    %16 = vector.broadcast %15 : vector<1x128xf32> to vector<256x128xf32>
    %17 = arith.mulf %14, %16 : vector<256x128xf32>
    %c0_9 = arith.constant 0 : index
    %c0_10 = arith.constant 0 : index
    %18 = vector.load %arg6[%c0_9, %c0_10] : memref<1x128xf32, #tpu.memory_space<vmem>>, vector<1x128xf32>
    %19 = vector.broadcast %18 : vector<1x128xf32> to vector<256x128xf32>
    %20 = arith.addf %17, %19 : vector<256x128xf32>
    %c0_11 = arith.constant 0 : index
    %c0_12 = arith.constant 0 : index
    %21 = vector.load %arg7[%c0_11, %c0_12] : memref<256x128xf32, #tpu.memory_space<vmem>>, vector<256x128xf32>
    tpu.vector_store %arg7[%c0_11, %c0_12], %20 {strides = array<i32>} : memref<256x128xf32, #tpu.memory_space<vmem>>, vector<256x128xf32>,
    return
  }
  func.func @transform_0(%arg0: i32) -> i32 {
    %c0_i32 = arith.constant 0 : i32
    %c0_i32_0 = arith.constant 0 : i32
    return %c0_i32 : i32
  }
  func.func @transform_1(%arg0: i32) -> i32 {
    %c0_i32 = arith.constant 0 : i32
    %c0_i32_0 = arith.constant 0 : i32
    return %c0_i32 : i32
  }
  func.func @transform_2(%arg0: i32) -> (i32, i32) {
    %c0_i32 = arith.constant 0 : i32
    %c0_i32_0 = arith.constant 0 : i32
    return %arg0, %c0_i32 : i32, i32
  }
  func.func @transform_3(%arg0: i32) -> (i32, i32) {
    %c0_i32 = arith.constant 0 : i32
    %c0_i32_0 = arith.constant 0 : i32
    %c0_i32_1 = arith.constant 0 : i32
    return %c0_i32, %c0_i32_0 : i32, i32
  }
  func.func @transform_4(%arg0: i32) -> (i32, i32) {
    %c0_i32 = arith.constant 0 : i32
    %c0_i32_0 = arith.constant 0 : i32
    %c0_i32_1 = arith.constant 0 : i32
    return %c0_i32, %c0_i32_0 : i32, i32
  }
  func.func @transform_5(%arg0: i32) -> (i32, i32) {
    %c0_i32 = arith.constant 0 : i32
    %c0_i32_0 = arith.constant 0 : i32
    %c0_i32_1 = arith.constant 0 : i32
    return %c0_i32, %c0_i32_0 : i32, i32
  }
  func.func @transform_6(%arg0: i32) -> (i32, i32) {
    %c0_i32 = arith.constant 0 : i32
    %c0_i32_0 = arith.constant 0 : i32
    return %arg0, %c0_i32 : i32, i32
  }
}

</mosaic_0001>

<llo_original>
// kernel: tpu_custom_call.1
$region0: #{tpu_custom_call.1}
  #allocation0 [shape = 'u32[]', space=smem, size = 0x4, offset = 0x4, fixed_abs, tag = 'smem constant byte address 0x4 - core index']
  #allocation1 [shape = 'u32[144,128]{1,0:T(1,128)}', space=vmem, size = 0x12000, scoped, tag = 'internal scratch']
  #allocation2 [shape = 'f32[1]{0:T(128)S(6)}', space=smem, size = 0x200, scoped, tag = 'scoped memory for tpu_custom_call.1']
  #allocation3 [shape = 'f32[1]{0:T(128)S(6)}', space=smem, size = 0x200, scoped, tag = 'scoped memory for tpu_custom_call.1']
  %s0 = inlined_call_operand.<no memory space> [shape: f32[1], index: 0, kind: input, shape index: {}]
  %s1 = inlined_call_operand.<no memory space> [shape: f32[1], index: 1, kind: input, shape index: {}]
  %s2 = inlined_call_operand.vmem [shape: f32[512,36], index: 2, kind: input, shape index: {}]
  %s3 = inlined_call_operand.vmem [shape: bf16[36,128], index: 3, kind: input, shape index: {}]
  %s4 = inlined_call_operand.vmem [shape: f32[1,128], index: 4, kind: input, shape index: {}]
  %s5 = inlined_call_operand.vmem [shape: f32[1,128], index: 5, kind: input, shape index: {}]
  %s6 = inlined_call_operand.hbm [shape: f32[512,128], index: 6, kind: output, shape index: {}]
  %s7 = sld [smem:[#allocation0]]
  $region57: #{tpu_custom_call.1} parent=0
    _
  %s9 = ssub.s32 1, %s7
  %s10 = scalar_select 0, %s9, %s7
  %11 = sst [smem:[#allocation2]] %s0
  %12 = sst [smem:[#allocation3]] %s1
  $region1: #{tpu_custom_call.1} parent=0
    #allocation4 [shape = 'u8[262144]{0}', space=vmem, size = 0x40000, scoped, tag = 'output window, operand 0']
    #allocation5 [shape = 's32[2]{0}', space=sflag, size = 0x8, scoped, tag = 'scoped memory for tpu_custom_call.1']
    %13 = vsyncpa [#allocation5], 0
    %s14 = scalar_lea.sflag [#allocation5], 1
    %15 = vsyncpa %s14, 0
    loop: start=0, step=1, limit=4
    $region2: #{tpu_custom_call.1} parent=1 // loop_pre_header
      _
    $region3: #{tpu_custom_call.1} parent=1 // loop_header
      %s17 = sphi 0, %s21
      %p18 = scmp.ge.s32.totalorder %s17, 4
      %s25 = sphi 0, %s25
      %s27 = sphi 0, %s25
      %s28 = sphi 0, %s27
      %s42 = sphi 0, %s28
      %s46 = sphi 0, %s46
      %s48 = sphi 0, %s46
      %s49 = sphi 0, %s48
      %s63 = sphi 0, %s49
      %s69 = sphi 0, %s71
      %s72 = sphi 0, %s69
      %s73 = sphi 0, %s72
      %s89 = sphi 0, %s73
      %s93 = sphi 0, %s93
      %s95 = sphi 0, %s93
      %s96 = sphi 0, %s95
      %s110 = sphi 0, %s96
      %s114 = sphi 0, %s114
      %s116 = sphi 0, %s114
      %s117 = sphi 0, %s116
      %s131 = sphi 0, %s117
      %s135 = sphi 0, %s135
      %s137 = sphi 0, %s135
      %s138 = sphi 0, %s137
      %s152 = sphi 0, %s138
      %s158 = sphi 0, %s160
      %s161 = sphi 0, %s158
      %s162 = sphi 0, %s161
      %s178 = sphi 0, %s162
    $region4: #{tpu_custom_call.1} parent=1 // loop_header_branch
      %20 = sbr.rel (%p18) target = $region8
    $region5: #{tpu_custom_call.1} parent=1 // loop_body
      %s22 = ssub.s32 %s17, 1
      %s23 = ssub.s32 %s17, 2
      %s24 = sadd.s32 %s17, 1
      %s26 = sadd.s32 %s25, 1
      %p29 = scmp.eq.s32.totalorder %s17, 1
      %p30 = scmp.ne.s32.totalorder %s25, %s27
      %p31 = scmp.eq.s32.totalorder %s17, 0
      %p32 = por %p30, %p31
      %p33 = scmp.ne.s32.totalorder %s25, %s27
      %p34 = scmp.eq.s32.totalorder %s22, 1
      %p35 = por %p33, %p34
      %p36 = scmp.ne.s32.totalorder %s27, %s28
      %p37 = scmp.eq.s32.totalorder %s22, 0
      %p38 = por %p36, %p37
      %p39 = scmp.ne.s32.totalorder %s27, %s28
      %p40 = scmp.eq.s32.totalorder %s23, 1
      %p41 = por %p39, %p40
      %p43 = scmp.ne.s32.totalorder %s28, %s42
      %p44 = scmp.eq.s32.totalorder %s23, 0
      %p45 = por %p43, %p44
      %s47 = sadd.s32 %s46, 1
      %p50 = scmp.eq.s32.totalorder %s17, 1
      %p51 = scmp.ne.s32.totalorder %s46, %s48
      %p52 = scmp.eq.s32.totalorder %s17, 0
      %p53 = por %p51, %p52
      %p54 = scmp.ne.s32.totalorder %s46, %s48
      %p55 = scmp.eq.s32.totalorder %s22, 1
      %p56 = por %p54, %p55
      %p57 = scmp.ne.s32.totalorder %s48, %s49
      %p58 = scmp.eq.s32.totalorder %s22, 0
      %p59 = por %p57, %p58
      %p60 = scmp.ne.s32.totalorder %s48, %s49
      %p61 = scmp.eq.s32.totalorder %s23, 1
      %p62 = por %p60, %p61
      %p64 = scmp.ne.s32.totalorder %s49, %s63
      %p65 = scmp.eq.s32.totalorder %s23, 0
      %p66 = por %p64, %p65
      %s67 = ssub.s32 %s17, %s24
      %p68 = scmp.eq.s32.totalorder %s67, 0
      %s70 = sadd.s32 %s69, 1
      %s71 = scalar_select %p68, %s69, %s70
      %p74 = pneg %p68
      %p75 = scmp.eq.s32.totalorder %s17, 1
      %p76 = por %p74, %p75
      %p77 = scmp.ne.s32.totalorder %s69, %s72
      %p78 = scmp.eq.s32.totalorder %s17, 0
      %p79 = por %p77, %p78
      %p80 = scmp.ne.s32.totalorder %s69, %s72
      %p81 = scmp.eq.s32.totalorder %s22, 1
      %p82 = por %p80, %p81
      %p83 = scmp.ne.s32.totalorder %s72, %s73
      %p84 = scmp.eq.s32.totalorder %s22, 0
      %p85 = por %p83, %p84
      %p86 = scmp.ne.s32.totalorder %s72, %s73
      %p87 = scmp.eq.s32.totalorder %s23, 1
      %p88 = por %p86, %p87
      %p90 = scmp.ne.s32.totalorder %s73, %s89
      %p91 = scmp.eq.s32.totalorder %s23, 0
      %p92 = por %p90, %p91
      %s94 = sadd.s32 %s93, 1
      %p97 = scmp.eq.s32.totalorder %s17, 1
      %p98 = scmp.ne.s32.totalorder %s93, %s95
      %p99 = scmp.eq.s32.totalorder %s17, 0
      %p100 = por %p98, %p99
      %p101 = scmp.ne.s32.totalorder %s93, %s95
      %p102 = scmp.eq.s32.totalorder %s22, 1
      %p103 = por %p101, %p102
      %p104 = scmp.ne.s32.totalorder %s95, %s96
      %p105 = scmp.eq.s32.totalorder %s22, 0
      %p106 = por %p104, %p105
      %p107 = scmp.ne.s32.totalorder %s95, %s96
      %p108 = scmp.eq.s32.totalorder %s23, 1
      %p109 = por %p107, %p108
      %p111 = scmp.ne.s32.totalorder %s96, %s110
      %p112 = scmp.eq.s32.totalorder %s23, 0
      %p113 = por %p111, %p112
      %s115 = sadd.s32 %s114, 1
      %p118 = scmp.eq.s32.totalorder %s17, 1
      %p119 = scmp.ne.s32.totalorder %s114, %s116
      %p120 = scmp.eq.s32.totalorder %s17, 0
      %p121 = por %p119, %p120
      %p122 = scmp.ne.s32.totalorder %s114, %s116
      %p123 = scmp.eq.s32.totalorder %s22, 1
      %p124 = por %p122, %p123
      %p125 = scmp.ne.s32.totalorder %s116, %s117
      %p126 = scmp.eq.s32.totalorder %s22, 0
      %p127 = por %p125, %p126
      %p128 = scmp.ne.s32.totalorder %s116, %s117
      %p129 = scmp.eq.s32.totalorder %s23, 1
      %p130 = por %p128, %p129
      %p132 = scmp.ne.s32.totalorder %s117, %s131
      %p133 = scmp.eq.s32.totalorder %s23, 0
      %p134 = por %p132, %p133
      %s136 = sadd.s32 %s135, 1
      %p139 = scmp.eq.s32.totalorder %s17, 1
      %p140 = scmp.ne.s32.totalorder %s135, %s137
      %p141 = scmp.eq.s32.totalorder %s17, 0
      %p142 = por %p140, %p141
      %p143 = scmp.ne.s32.totalorder %s135, %s137
      %p144 = scmp.eq.s32.totalorder %s22, 1
      %p145 = por %p143, %p144
      %p146 = scmp.ne.s32.totalorder %s137, %s138
      %p147 = scmp.eq.s32.totalorder %s22, 0
      %p148 = por %p146, %p147
      %p149 = scmp.ne.s32.totalorder %s137, %s138
      %p150 = scmp.eq.s32.totalorder %s23, 1
      %p151 = por %p149, %p150
      %p153 = scmp.ne.s32.totalorder %s138, %s152
      %p154 = scmp.eq.s32.totalorder %s23, 0
      %p155 = por %p153, %p154
      %s156 = ssub.s32 %s17, %s24
      %p157 = scmp.eq.s32.totalorder %s156, 0
      %s159 = sadd.s32 %s158, 1
      %s160 = scalar_select %p157, %s158, %s159
      %p163 = pneg %p157
      %p164 = scmp.eq.s32.totalorder %s17, 1
      %p165 = por %p163, %p164
      %p166 = scmp.ne.s32.totalorder %s158, %s161
      %p167 = scmp.eq.s32.totalorder %s17, 0
      %p168 = por %p166, %p167
      %p169 = scmp.ne.s32.totalorder %s158, %s161
      %p170 = scmp.eq.s32.totalorder %s22, 1
      %p171 = por %p169, %p170
      %p172 = scmp.ne.s32.totalorder %s161, %s162
      %p173 = scmp.eq.s32.totalorder %s22, 0
      %p174 = por %p172, %p173
      %p175 = scmp.ne.s32.totalorder %s161, %s162
      %p176 = scmp.eq.s32.totalorder %s23, 1
      %p177 = por %p175, %p176
      %p179 = scmp.ne.s32.totalorder %s162, %s178
      %p180 = scmp.eq.s32.totalorder %s23, 0
      %p181 = por %p179, %p180
      %p182 = scmp.le.s32.totalorder 1, %s17
      %p183 = scmp.lt.s32.totalorder %s17, 3
      %p184 = pnand %p182, %p183
      %p185 = pneg %p184
      // Predicated region
      $region9: #{tpu_custom_call.1} parent=5 // pred_check
        _
      $region10: #{tpu_custom_call.1} parent=5 // pred_check_branch
        %187 = sbr.rel (%p184) target = $region12
      $region11: #{tpu_custom_call.1} parent=5 // pred_region
        %s188 = ssub.s32 %s17, 1
        // Predicated region
        $region13: #{tpu_custom_call.1} parent=11 // pred_check
          %p189 = pneg %p38
        $region14: #{tpu_custom_call.1} parent=11 // pred_check_branch
          %191 = sbr.rel (%p189) target = $region16
        $region15: #{tpu_custom_call.1} parent=11 // pred_region
          _
        $region16: #{tpu_custom_call.1} parent=11 // pred_fallthru
          _
        // Predicated region
        $region17: #{tpu_custom_call.1} parent=11 // pred_check
          %p192 = pneg %p59
        $region18: #{tpu_custom_call.1} parent=11 // pred_check_branch
          %194 = sbr.rel (%p192) target = $region20
        $region19: #{tpu_custom_call.1} parent=11 // pred_region
          _
        $region20: #{tpu_custom_call.1} parent=11 // pred_fallthru
          _
        // Predicated region
        $region21: #{tpu_custom_call.1} parent=11 // pred_check
          %p195 = pneg %p106
        $region22: #{tpu_custom_call.1} parent=11 // pred_check_branch
          %197 = sbr.rel (%p195) target = $region24
        $region23: #{tpu_custom_call.1} parent=11 // pred_region
          _
        $region24: #{tpu_custom_call.1} parent=11 // pred_fallthru
          _
        // Predicated region
        $region25: #{tpu_custom_call.1} parent=11 // pred_check
          %p198 = pneg %p127
        $region26: #{tpu_custom_call.1} parent=11 // pred_check_branch
          %200 = sbr.rel (%p198) target = $region28
        $region27: #{tpu_custom_call.1} parent=11 // pred_region
          _
        $region28: #{tpu_custom_call.1} parent=11 // pred_fallthru
          _
        // Predicated region
        $region29: #{tpu_custom_call.1} parent=11 // pred_check
          %p201 = pneg %p148
        $region30: #{tpu_custom_call.1} parent=11 // pred_check_branch
          %203 = sbr.rel (%p201) target = $region32
        $region31: #{tpu_custom_call.1} parent=11 // pred_region
          _
        $region32: #{tpu_custom_call.1} parent=11 // pred_fallthru
          _
      $region12: #{tpu_custom_call.1} parent=5 // pred_fallthru
        _
      %p204 = scmp.lt.s32.totalorder %s17, 2
      // Predicated region
      $region33: #{tpu_custom_call.1} parent=5 // pred_check
        %p205 = pneg %p204
      $region34: #{tpu_custom_call.1} parent=5 // pred_check_branch
        %207 = sbr.rel (%p205) target = $region36
      $region35: #{tpu_custom_call.1} parent=5 // pred_region
        // Predicated region
        $region37: #{tpu_custom_call.1} parent=35 // pred_check
          %p208 = pneg %p79
        $region38: #{tpu_custom_call.1} parent=35 // pred_check_branch
          %210 = sbr.rel (%p208) target = $region40
        $region39: #{tpu_custom_call.1} parent=35 // pred_region
          %s211 = smul.u32 32, %s17
          %p212 = scmp.lt.s32.totalorder %s211, 63
          %s213 = scalar_select %p212, %s211, 63
          %s214 = smul.addr %s213, 8
          %s215 = scalar_lea.vmem %s2, %s214
          %s216 = smul.u32 32, %s17
        $region40: #{tpu_custom_call.1} parent=35 // pred_fallthru
          _
      $region36: #{tpu_custom_call.1} parent=5 // pred_fallthru
        _
      %p217 = scmp.le.s32.totalorder 1, %s17
      %p218 = scmp.lt.s32.totalorder %s17, 3
      %p219 = pnand %p217, %p218
      %p220 = pneg %p219
      // Predicated region
      $region41: #{tpu_custom_call.1} parent=5 // pred_check
        _
      $region42: #{tpu_custom_call.1} parent=5 // pred_check_branch
        %222 = sbr.rel (%p219) target = $region44
      $region43: #{tpu_custom_call.1} parent=5 // pred_region
        %s223 = ssub.s32 %s17, 1
        %p224 = pneg %p38
        %p225 = pneg %p35
        %p226 = pneg %p59
        %p227 = pneg %p56
        %s228 = smul.u32 32, %s22
        %p229 = scmp.lt.s32.totalorder %s228, 63
        %s230 = scalar_select %p229, %s228, 63
        %s231 = smul.addr %s230, 8
        %s232 = scalar_lea.vmem %s2, %s231
        %p233 = pneg %p85
        %p234 = pneg %p82
        %p235 = pneg %p106
        %p236 = pneg %p103
        %p237 = pneg %p127
        %p238 = pneg %p124
        %p239 = pneg %p148
        %p240 = pneg %p145
        %p241 = pneg %p174
        %p242 = pneg %p171
        %s243 = sand.u32 %s161, 1
        %s244 = scalar_lea.sflag [#allocation5], %s243
        %s245 = sand.u32 %s161, 1
        %s246 = smul.addr %s245, 256
        %s247 = scalar_lea.vmem [#allocation4], %s246
        %s248 = smul.u32 32, %s22
        %p249 = scmp.lt.s32.totalorder %s248, 63
        %s250 = scalar_select %p249, %s248, 63
        %s251 = smul.addr %s250, 8
        %s252 = scalar_lea.vmem %s2, %s251
        %s253 = smul.u32 32, %s22
        %s254 = smul.u32 32, %s22
        %s256 = sld [smem:[#allocation2]]
        %s257 = sld [smem:[#allocation3]]
        %v258 = vld [vmem:[%s252] sm:$0xff]
        %v259 = vld [vmem:[%s252 + $0x8] sm:$0xff]
        %v260 = vld [vmem:[%s252 + $0x10] sm:$0xff]
        %v261 = vld [vmem:[%s252 + $0x18] sm:$0xff]
        %v262 = vld [vmem:[%s252 + $0x20] sm:$0xff]
        %v263 = vld [vmem:[%s252 + $0x28] sm:$0xff]
        %v264 = vld [vmem:[%s252 + $0x30] sm:$0xff]
        %v265 = vld [vmem:[%s252 + $0x38] sm:$0xff]
        %v266 = vld [vmem:[%s252 + $0x40] sm:$0xff]
        %v267 = vld [vmem:[%s252 + $0x48] sm:$0xff]
        %v268 = vld [vmem:[%s252 + $0x50] sm:$0xff]
        %v269 = vld [vmem:[%s252 + $0x58] sm:$0xff]
        %v270 = vld [vmem:[%s252 + $0x60] sm:$0xff]
        %v271 = vld [vmem:[%s252 + $0x68] sm:$0xff]
        %v272 = vld [vmem:[%s252 + $0x70] sm:$0xff]
        %v273 = vld [vmem:[%s252 + $0x78] sm:$0xff]
        %v274 = vld [vmem:[%s252 + $0x80] sm:$0xff]
        %v275 = vld [vmem:[%s252 + $0x88] sm:$0xff]
        %v276 = vld [vmem:[%s252 + $0x90] sm:$0xff]
        %v277 = vld [vmem:[%s252 + $0x98] sm:$0xff]
        %v278 = vld [vmem:[%s252 + $0xa0] sm:$0xff]
        %v279 = vld [vmem:[%s252 + $0xa8] sm:$0xff]
        %v280 = vld [vmem:[%s252 + $0xb0] sm:$0xff]
        %v281 = vld [vmem:[%s252 + $0xb8] sm:$0xff]
        %v282 = vld [vmem:[%s252 + $0xc0] sm:$0xff]
        %v283 = vld [vmem:[%s252 + $0xc8] sm:$0xff]
        %v284 = vld [vmem:[%s252 + $0xd0] sm:$0xff]
        %v285 = vld [vmem:[%s252 + $0xd8] sm:$0xff]
        %v286 = vld [vmem:[%s252 + $0xe0] sm:$0xff]
        %v287 = vld [vmem:[%s252 + $0xe8] sm:$0xff]
        %v288 = vld [vmem:[%s252 + $0xf0] sm:$0xff]
        %v289 = vld [vmem:[%s252 + $0xf8] sm:$0xff]
        %v290 = vstv %s256
        %v291 = vmul.f32 %v258, %v290
        %v292 = vmul.f32 %v259, %v290
        %v293 = vmul.f32 %v260, %v290
        %v294 = vmul.f32 %v261, %v290
        %v295 = vmul.f32 %v262, %v290
        %v296 = vmul.f32 %v263, %v290
        %v297 = vmul.f32 %v264, %v290
        %v298 = vmul.f32 %v265, %v290
        %v299 = vmul.f32 %v266, %v290
        %v300 = vmul.f32 %v267, %v290
        %v301 = vmul.f32 %v268, %v290
        %v302 = vmul.f32 %v269, %v290
        %v303 = vmul.f32 %v270, %v290
        %v304 = vmul.f32 %v271, %v290
        %v305 = vmul.f32 %v272, %v290
        %v306 = vmul.f32 %v273, %v290
        %v307 = vmul.f32 %v274, %v290
        %v308 = vmul.f32 %v275, %v290
        %v309 = vmul.f32 %v276, %v290
        %v310 = vmul.f32 %v277, %v290
        %v311 = vmul.f32 %v278, %v290
        %v312 = vmul.f32 %v279, %v290
        %v313 = vmul.f32 %v280, %v290
        %v314 = vmul.f32 %v281, %v290
        %v315 = vmul.f32 %v282, %v290
        %v316 = vmul.f32 %v283, %v290
        %v317 = vmul.f32 %v284, %v290
        %v318 = vmul.f32 %v285, %v290
        %v319 = vmul.f32 %v286, %v290
        %v320 = vmul.f32 %v287, %v290
        %v321 = vmul.f32 %v288, %v290
        %v322 = vmul.f32 %v289, %v290
        %v323 = vround.ne.pseudo %v291
        %v324 = vround.ne.pseudo %v292
        %v325 = vround.ne.pseudo %v293
        %v326 = vround.ne.pseudo %v294
        %v327 = vround.ne.pseudo %v295
        %v328 = vround.ne.pseudo %v296
        %v329 = vround.ne.pseudo %v297
        %v330 = vround.ne.pseudo %v298
        %v331 = vround.ne.pseudo %v299
        %v332 = vround.ne.pseudo %v300
        %v333 = vround.ne.pseudo %v301
        %v334 = vround.ne.pseudo %v302
        %v335 = vround.ne.pseudo %v303
        %v336 = vround.ne.pseudo %v304
        %v337 = vround.ne.pseudo %v305
        %v338 = vround.ne.pseudo %v306
        %v339 = vround.ne.pseudo %v307
        %v340 = vround.ne.pseudo %v308
        %v341 = vround.ne.pseudo %v309
        %v342 = vround.ne.pseudo %v310
        %v343 = vround.ne.pseudo %v311
        %v344 = vround.ne.pseudo %v312
        %v345 = vround.ne.pseudo %v313
        %v346 = vround.ne.pseudo %v314
        %v347 = vround.ne.pseudo %v315
        %v348 = vround.ne.pseudo %v316
        %v349 = vround.ne.pseudo %v317
        %v350 = vround.ne.pseudo %v318
        %v351 = vround.ne.pseudo %v319
        %v352 = vround.ne.pseudo %v320
        %v353 = vround.ne.pseudo %v321
        %v354 = vround.ne.pseudo %v322
        %s355 = ssub.f32 0.0, %s257
        %s356 = ssub.f32 255.0, %s257
        %v357 = vstv %s355
        %v358 = vmax.f32 %v357, %v323
        %v359 = vmax.f32 %v357, %v324
        %v360 = vmax.f32 %v357, %v325
        %v361 = vmax.f32 %v357, %v326
        %v362 = vmax.f32 %v357, %v327
        %v363 = vmax.f32 %v357, %v328
        %v364 = vmax.f32 %v357, %v329
        %v365 = vmax.f32 %v357, %v330
        %v366 = vmax.f32 %v357, %v331
        %v367 = vmax.f32 %v357, %v332
        %v368 = vmax.f32 %v357, %v333
        %v369 = vmax.f32 %v357, %v334
        %v370 = vmax.f32 %v357, %v335
        %v371 = vmax.f32 %v357, %v336
        %v372 = vmax.f32 %v357, %v337
        %v373 = vmax.f32 %v357, %v338
        %v374 = vmax.f32 %v357, %v339
        %v375 = vmax.f32 %v357, %v340
        %v376 = vmax.f32 %v357, %v341
        %v377 = vmax.f32 %v357, %v342
        %v378 = vmax.f32 %v357, %v343
        %v379 = vmax.f32 %v357, %v344
        %v380 = vmax.f32 %v357, %v345
        %v381 = vmax.f32 %v357, %v346
        %v382 = vmax.f32 %v357, %v347
        %v383 = vmax.f32 %v357, %v348
        %v384 = vmax.f32 %v357, %v349
        %v385 = vmax.f32 %v357, %v350
        %v386 = vmax.f32 %v357, %v351
        %v387 = vmax.f32 %v357, %v352
        %v388 = vmax.f32 %v357, %v353
        %v389 = vmax.f32 %v357, %v354
        %v390 = vstv %s356
        %v391 = vmin.f32 %v390, %v358
        %v392 = vmin.f32 %v390, %v359
        %v393 = vmin.f32 %v390, %v360
        %v394 = vmin.f32 %v390, %v361
        %v395 = vmin.f32 %v390, %v362
        %v396 = vmin.f32 %v390, %v363
        %v397 = vmin.f32 %v390, %v364
        %v398 = vmin.f32 %v390, %v365
        %v399 = vmin.f32 %v390, %v366
        %v400 = vmin.f32 %v390, %v367
        %v401 = vmin.f32 %v390, %v368
        %v402 = vmin.f32 %v390, %v369
        %v403 = vmin.f32 %v390, %v370
        %v404 = vmin.f32 %v390, %v371
        %v405 = vmin.f32 %v390, %v372
        %v406 = vmin.f32 %v390, %v373
        %v407 = vmin.f32 %v390, %v374
        %v408 = vmin.f32 %v390, %v375
        %v409 = vmin.f32 %v390, %v376
        %v410 = vmin.f32 %v390, %v377
        %v411 = vmin.f32 %v390, %v378
        %v412 = vmin.f32 %v390, %v379
        %v413 = vmin.f32 %v390, %v380
        %v414 = vmin.f32 %v390, %v381
        %v415 = vmin.f32 %v390, %v382
        %v416 = vmin.f32 %v390, %v383
        %v417 = vmin.f32 %v390, %v384
        %v418 = vmin.f32 %v390, %v385
        %v419 = vmin.f32 %v390, %v386
        %v420 = vmin.f32 %v390, %v387
        %v421 = vmin.f32 %v390, %v388
        %v422 = vmin.f32 %v390, %v389
        %v423 = vpack.c.bf16 %v392, %v391
        %v424 = vpack.c.bf16 %v394, %v393
        %v425 = vpack.c.bf16 %v396, %v395
        %v426 = vpack.c.bf16 %v398, %v397
        %v427 = vpack.c.bf16 %v400, %v399
        %v428 = vpack.c.bf16 %v402, %v401
        %v429 = vpack.c.bf16 %v404, %v403
        %v430 = vpack.c.bf16 %v406, %v405
        %v431 = vpack.c.bf16 %v408, %v407
        %v432 = vpack.c.bf16 %v410, %v409
        %v433 = vpack.c.bf16 %v412, %v411
        %v434 = vpack.c.bf16 %v414, %v413
        %v435 = vpack.c.bf16 %v416, %v415
        %v436 = vpack.c.bf16 %v418, %v417
        %v437 = vpack.c.bf16 %v420, %v419
        %v438 = vpack.c.bf16 %v422, %v421
        %v439 = vld [vmem:[%s3] sm:$0xf]
        %v440 = vld [vmem:[%s3 + $0x4] sm:$0xf]
        %v441 = vld [vmem:[%s3 + $0x8] sm:$0xf]
        %v442 = vld [vmem:[%s3 + $0xc] sm:$0xf]
        %v443 = vld [vmem:[%s3 + $0x10] sm:$0x3]
        %v449 = vunpack.c.l.b16 %v439
        %v450 = vunpack.c.l.b16 %v440
        %v451 = vunpack.c.l.b16 %v441
        %v452 = vunpack.c.l.b16 %v442
        %v453 = vunpack.c.l.b16 %v443
        %v454 = vpack.c.b16 %v450, %v449
        %v455 = vpack.c.b16 %v452, %v451
        %v456 = vpack.c.b16 %v453, %v453
        %vm459 = vcmask 293888
        %v461 = vsel %vm459, %v423, 0
        %v464 = vsel %vm459, %v424, 0
        %v467 = vsel %vm459, %v425, 0
        %v470 = vsel %vm459, %v426, 0
        %v473 = vsel %vm459, %v427, 0
        %v476 = vsel %vm459, %v428, 0
        %v479 = vsel %vm459, %v429, 0
        %v482 = vsel %vm459, %v430, 0
        %v485 = vsel %vm459, %v431, 0
        %v488 = vsel %vm459, %v432, 0
        %v491 = vsel %vm459, %v433, 0
        %v494 = vsel %vm459, %v434, 0
        %v497 = vsel %vm459, %v435, 0
        %v500 = vsel %vm459, %v436, 0
        %v503 = vsel %vm459, %v437, 0
        %v506 = vsel %vm459, %v438, 0
        %vm508 = vcmask 1041408
        %v510 = vsel %vm508, %v456, 0
        %512 = vmatprep.subr.bf16.mxu0 0
        %513 = vmatpush1.bf16.msra.mxu0 0
        %514 = vmatprep.subr.bf16.mxu0 0
        %515 = vmatpush1.bf16.msra.mxu0 0
        %516 = vmatprep.subr.bf16.mxu0 0
        %517 = vmatpush1.bf16.msra.mxu0 0
        %518 = vmatprep.subr.bf16.mxu0 0
        %519 = vmatpush1.bf16.msra.mxu0 0
        %520 = vmatprep.subr.bf16.mxu0 0
        %521 = vmatpush1.bf16.msra.mxu0 0
        %522 = vmatprep.subr.bf16.mxu0 0
        %523 = vmatpush1.bf16.msra.mxu0 %v510
        %524 = vmatprep.subr.bf16.mxu0 0
        %525 = vmatpush1.bf16.msra.mxu0 %v455
        %526 = vmatprep.subr.bf16.mxu0 0
        %527 = vmatpush1.bf16.msra.mxu0 %v454
        %528 = vmatprep.subr.bf16.mxu0 0
        %529 = vmatpush2.bf16.msra.mxu0 0
        %530 = vmatprep.subr.bf16.mxu0 0
        %531 = vmatpush2.bf16.msra.mxu0 0
        %532 = vmatprep.subr.bf16.mxu0 0
        %533 = vmatpush2.bf16.msra.mxu0 0
        %534 = vmatprep.subr.bf16.mxu0 0
        %535 = vmatpush2.bf16.msra.mxu0 0
        %536 = vmatprep.subr.bf16.mxu0 0
        %537 = vmatpush2.bf16.msra.mxu0 0
        %538 = vmatprep.subr.bf16.mxu0 0
        %539 = vmatpush2.bf16.msra.mxu0 0
        %540 = vmatprep.subr.bf16.mxu0 0
        %541 = vmatpush2.bf16.msra.mxu0 0
        %542 = vmatprep.subr.bf16.mxu0 0
        %543 = vmatpush2.bf16.msra.mxu0 0
        %544 = vmatprep.mubr.bf16.mxu0 0
        %545 = vmatmul.mubr.bf16.gmra.mxu0 %v461
        %v546 = vpop.f32.mrf.mxu0
        %v547 = vadd.f32 0.0, %v546
        %v548 = vpop.f32.mrf.mxu0
        %v549 = vpop.f32.mrf.mxu0
        %v550 = vadd.f32 0.0, %v549
        %v551 = vpop.f32.mrf.mxu0
        %552 = vmatprep.mubr.bf16.mxu0 0
        %553 = vmatmul.mubr.bf16.gmra.mxu0 %v464
        %v554 = vpop.f32.mrf.mxu0
        %v555 = vadd.f32 0.0, %v554
        %v556 = vpop.f32.mrf.mxu0
        %v557 = vpop.f32.mrf.mxu0
        %v558 = vadd.f32 0.0, %v557
        %v559 = vpop.f32.mrf.mxu0
        %560 = vmatprep.mubr.bf16.mxu0 0
        %561 = vmatmul.mubr.bf16.gmra.mxu0 %v467
        %v562 = vpop.f32.mrf.mxu0
        %v563 = vadd.f32 0.0, %v562
        %v564 = vpop.f32.mrf.mxu0
        %v565 = vpop.f32.mrf.mxu0
        %v566 = vadd.f32 0.0, %v565
        %v567 = vpop.f32.mrf.mxu0
        %568 = vmatprep.mubr.bf16.mxu0 0
        %569 = vmatmul.mubr.bf16.gmra.mxu0 %v470
        %v570 = vpop.f32.mrf.mxu0
        %v571 = vadd.f32 0.0, %v570
        %v572 = vpop.f32.mrf.mxu0
        %v573 = vpop.f32.mrf.mxu0
        %v574 = vadd.f32 0.0, %v573
        %v575 = vpop.f32.mrf.mxu0
        %576 = vmatprep.mubr.bf16.mxu0 0
        %577 = vmatmul.mubr.bf16.gmra.mxu0 %v473
        %v578 = vpop.f32.mrf.mxu0
        %v579 = vadd.f32 0.0, %v578
        %v580 = vpop.f32.mrf.mxu0
        %v581 = vpop.f32.mrf.mxu0
        %v582 = vadd.f32 0.0, %v581
        %v583 = vpop.f32.mrf.mxu0
        %584 = vmatprep.mubr.bf16.mxu0 0
        %585 = vmatmul.mubr.bf16.gmra.mxu0 %v476
        %v586 = vpop.f32.mrf.mxu0
        %v587 = vadd.f32 0.0, %v586
        %v588 = vpop.f32.mrf.mxu0
        %v589 = vpop.f32.mrf.mxu0
        %v590 = vadd.f32 0.0, %v589
        %v591 = vpop.f32.mrf.mxu0
        %592 = vmatprep.mubr.bf16.mxu0 0
        %593 = vmatmul.mubr.bf16.gmra.mxu0 %v479
        %v594 = vpop.f32.mrf.mxu0
        %v595 = vadd.f32 0.0, %v594
        %v596 = vpop.f32.mrf.mxu0
        %v597 = vpop.f32.mrf.mxu0
        %v598 = vadd.f32 0.0, %v597
        %v599 = vpop.f32.mrf.mxu0
        %600 = vmatprep.mubr.bf16.mxu0 0
        %601 = vmatmul.mubr.bf16.gmra.mxu0 %v482
        %v602 = vpop.f32.mrf.mxu0
        %v603 = vadd.f32 0.0, %v602
        %v604 = vpop.f32.mrf.mxu0
        %v605 = vpop.f32.mrf.mxu0
        %v606 = vadd.f32 0.0, %v605
        %v607 = vpop.f32.mrf.mxu0
        %608 = vmatprep.mubr.bf16.mxu0 0
        %609 = vmatmul.mubr.bf16.gmra.mxu0 %v485
        %v610 = vpop.f32.mrf.mxu0
        %v611 = vadd.f32 0.0, %v610
        %v612 = vpop.f32.mrf.mxu0
        %v613 = vpop.f32.mrf.mxu0
        %v614 = vadd.f32 0.0, %v613
        %v615 = vpop.f32.mrf.mxu0
        %616 = vmatprep.mubr.bf16.mxu0 0
        %617 = vmatmul.mubr.bf16.gmra.mxu0 %v488
        %v618 = vpop.f32.mrf.mxu0
        %v619 = vadd.f32 0.0, %v618
        %v620 = vpop.f32.mrf.mxu0
        %v621 = vpop.f32.mrf.mxu0
        %v622 = vadd.f32 0.0, %v621
        %v623 = vpop.f32.mrf.mxu0
        %624 = vmatprep.mubr.bf16.mxu0 0
        %625 = vmatmul.mubr.bf16.gmra.mxu0 %v491
        %v626 = vpop.f32.mrf.mxu0
        %v627 = vadd.f32 0.0, %v626
        %v628 = vpop.f32.mrf.mxu0
        %v629 = vpop.f32.mrf.mxu0
        %v630 = vadd.f32 0.0, %v629
        %v631 = vpop.f32.mrf.mxu0
        %632 = vmatprep.mubr.bf16.mxu0 0
        %633 = vmatmul.mubr.bf16.gmra.mxu0 %v494
        %v634 = vpop.f32.mrf.mxu0
        %v635 = vadd.f32 0.0, %v634
        %v636 = vpop.f32.mrf.mxu0
        %v637 = vpop.f32.mrf.mxu0
        %v638 = vadd.f32 0.0, %v637
        %v639 = vpop.f32.mrf.mxu0
        %640 = vmatprep.mubr.bf16.mxu0 0
        %641 = vmatmul.mubr.bf16.gmra.mxu0 %v497
        %v642 = vpop.f32.mrf.mxu0
        %v643 = vadd.f32 0.0, %v642
        %v644 = vpop.f32.mrf.mxu0
        %v645 = vpop.f32.mrf.mxu0
        %v646 = vadd.f32 0.0, %v645
        %v647 = vpop.f32.mrf.mxu0
        %648 = vmatprep.mubr.bf16.mxu0 0
        %649 = vmatmul.mubr.bf16.gmra.mxu0 %v500
        %v650 = vpop.f32.mrf.mxu0
        %v651 = vadd.f32 0.0, %v650
        %v652 = vpop.f32.mrf.mxu0
        %v653 = vpop.f32.mrf.mxu0
        %v654 = vadd.f32 0.0, %v653
        %v655 = vpop.f32.mrf.mxu0
        %656 = vmatprep.mubr.bf16.mxu0 0
        %657 = vmatmul.mubr.bf16.gmra.mxu0 %v503
        %v658 = vpop.f32.mrf.mxu0
        %v659 = vadd.f32 0.0, %v658
        %v660 = vpop.f32.mrf.mxu0
        %v661 = vpop.f32.mrf.mxu0
        %v662 = vadd.f32 0.0, %v661
        %v663 = vpop.f32.mrf.mxu0
        %664 = vmatprep.mubr.bf16.mxu0 0
        %665 = vmatmul.mubr.bf16.gmra.mxu0 %v506
        %v666 = vpop.f32.mrf.mxu0
        %v667 = vadd.f32 0.0, %v666
        %v668 = vpop.f32.mrf.mxu0
        %v669 = vpop.f32.mrf.mxu0
        %v670 = vadd.f32 0.0, %v669
        %v671 = vpop.f32.mrf.mxu0
        %672 = vdwg.mxu0
        %v673 = vld [vmem:[%s4] sm:$0x1]
        %v675 = vlaneseq
        %v676 = vshrl.u32 %v675, 7
        %v677 = vsub.s32 0, %v676
        %v678 = vrot.slane %v673, %v677
        %v680 = vmul.f32 %v547, %v678
        %v681 = vmul.f32 %v550, %v678
        %v682 = vmul.f32 %v555, %v678
        %v683 = vmul.f32 %v558, %v678
        %v684 = vmul.f32 %v563, %v678
        %v685 = vmul.f32 %v566, %v678
        %v686 = vmul.f32 %v571, %v678
        %v687 = vmul.f32 %v574, %v678
        %v688 = vmul.f32 %v579, %v678
        %v689 = vmul.f32 %v582, %v678
        %v690 = vmul.f32 %v587, %v678
        %v691 = vmul.f32 %v590, %v678
        %v692 = vmul.f32 %v595, %v678
        %v693 = vmul.f32 %v598, %v678
        %v694 = vmul.f32 %v603, %v678
        %v695 = vmul.f32 %v606, %v678
        %v696 = vmul.f32 %v611, %v678
        %v697 = vmul.f32 %v614, %v678
        %v698 = vmul.f32 %v619, %v678
        %v699 = vmul.f32 %v622, %v678
        %v700 = vmul.f32 %v627, %v678
        %v701 = vmul.f32 %v630, %v678
        %v702 = vmul.f32 %v635, %v678
        %v703 = vmul.f32 %v638, %v678
        %v704 = vmul.f32 %v643, %v678
        %v705 = vmul.f32 %v646, %v678
        %v706 = vmul.f32 %v651, %v678
        %v707 = vmul.f32 %v654, %v678
        %v708 = vmul.f32 %v659, %v678
        %v709 = vmul.f32 %v662, %v678
        %v710 = vmul.f32 %v667, %v678
        %v711 = vmul.f32 %v670, %v678
        %v712 = vld [vmem:[%s5] sm:$0x1]
        %v714 = vlaneseq
        %v715 = vshrl.u32 %v714, 7
        %v716 = vsub.s32 0, %v715
        %v717 = vrot.slane %v712, %v716
        %v719 = vadd.f32 %v680, %v717
        %v720 = vadd.f32 %v681, %v717
        %v721 = vadd.f32 %v682, %v717
        %v722 = vadd.f32 %v683, %v717
        %v723 = vadd.f32 %v684, %v717
        %v724 = vadd.f32 %v685, %v717
        %v725 = vadd.f32 %v686, %v717
        %v726 = vadd.f32 %v687, %v717
        %v727 = vadd.f32 %v688, %v717
        %v728 = vadd.f32 %v689, %v717
        %v729 = vadd.f32 %v690, %v717
        %v730 = vadd.f32 %v691, %v717
        %v731 = vadd.f32 %v692, %v717
        %v732 = vadd.f32 %v693, %v717
        %v733 = vadd.f32 %v694, %v717
        %v734 = vadd.f32 %v695, %v717
        %v735 = vadd.f32 %v696, %v717
        %v736 = vadd.f32 %v697, %v717
        %v737 = vadd.f32 %v698, %v717
        %v738 = vadd.f32 %v699, %v717
        %v739 = vadd.f32 %v700, %v717
        %v740 = vadd.f32 %v701, %v717
        %v741 = vadd.f32 %v702, %v717
        %v742 = vadd.f32 %v703, %v717
        %v743 = vadd.f32 %v704, %v717
        %v744 = vadd.f32 %v705, %v717
        %v745 = vadd.f32 %v706, %v717
        %v746 = vadd.f32 %v707, %v717
        %v747 = vadd.f32 %v708, %v717
        %v748 = vadd.f32 %v709, %v717
        %v749 = vadd.f32 %v710, %v717
        %v750 = vadd.f32 %v711, %v717
        %751 = vst [vmem:[%s247] sm:$0xff] %v719
        %752 = vst [vmem:[%s247 + $0x8] sm:$0xff] %v720
        %753 = vst [vmem:[%s247 + $0x10] sm:$0xff] %v721
        %754 = vst [vmem:[%s247 + $0x18] sm:$0xff] %v722
        %755 = vst [vmem:[%s247 + $0x20] sm:$0xff] %v723
        %756 = vst [vmem:[%s247 + $0x28] sm:$0xff] %v724
        %757 = vst [vmem:[%s247 + $0x30] sm:$0xff] %v725
        %758 = vst [vmem:[%s247 + $0x38] sm:$0xff] %v726
        %759 = vst [vmem:[%s247 + $0x40] sm:$0xff] %v727
        %760 = vst [vmem:[%s247 + $0x48] sm:$0xff] %v728
        %761 = vst [vmem:[%s247 + $0x50] sm:$0xff] %v729
        %762 = vst [vmem:[%s247 + $0x58] sm:$0xff] %v730
        %763 = vst [vmem:[%s247 + $0x60] sm:$0xff] %v731
        %764 = vst [vmem:[%s247 + $0x68] sm:$0xff] %v732
        %765 = vst [vmem:[%s247 + $0x70] sm:$0xff] %v733
        %766 = vst [vmem:[%s247 + $0x78] sm:$0xff] %v734
        %767 = vst [vmem:[%s247 + $0x80] sm:$0xff] %v735
        %768 = vst [vmem:[%s247 + $0x88] sm:$0xff] %v736
        %769 = vst [vmem:[%s247 + $0x90] sm:$0xff] %v737
        %770 = vst [vmem:[%s247 + $0x98] sm:$0xff] %v738
        %771 = vst [vmem:[%s247 + $0xa0] sm:$0xff] %v739
        %772 = vst [vmem:[%s247 + $0xa8] sm:$0xff] %v740
        %773 = vst [vmem:[%s247 + $0xb0] sm:$0xff] %v741
        %774 = vst [vmem:[%s247 + $0xb8] sm:$0xff] %v742
        %775 = vst [vmem:[%s247 + $0xc0] sm:$0xff] %v743
        %776 = vst [vmem:[%s247 + $0xc8] sm:$0xff] %v744
        %777 = vst [vmem:[%s247 + $0xd0] sm:$0xff] %v745
        %778 = vst [vmem:[%s247 + $0xd8] sm:$0xff] %v746
        %779 = vst [vmem:[%s247 + $0xe0] sm:$0xff] %v747
        %780 = vst [vmem:[%s247 + $0xe8] sm:$0xff] %v748
        %781 = vst [vmem:[%s247 + $0xf0] sm:$0xff] %v749
        %782 = vst [vmem:[%s247 + $0xf8] sm:$0xff] %v750
        %s783 = sand.u32 %s161, 1
        %s784 = scalar_lea.sflag [#allocation5], %s783
        %s785 = sand.u32 %s161, 1
        %s786 = smul.addr %s785, 256
        %s787 = scalar_lea.vmem [#allocation4], %s786
        // Predicated region
        $region45: #{tpu_custom_call.1} parent=43 // pred_check
          %p788 = pneg %p171
        $region46: #{tpu_custom_call.1} parent=43 // pred_check_branch
          %790 = sbr.rel (%p788) target = $region48
        $region47: #{tpu_custom_call.1} parent=43 // pred_region
          %s791 = smul.u32 32, %s22
          %s793 = ssub.s32 4096, 4096
          %794 = vsyncadd %s784, %s793
          %s795 = smul.addr %s791, 128
          %s796 = scalar_lea.hbm %s6, %s795
          %s797 = sshll.u32 %s787, 4
          %s798 = int_to_ptr.vmem [resolvable:$true] %s797
          %803 = dma.vmem_to_hbm [thread:$0]  %s798, 4096, %s796, %s784, 128, 128, 8
        $region48: #{tpu_custom_call.1} parent=43 // pred_fallthru
          _
      $region44: #{tpu_custom_call.1} parent=5 // pred_fallthru
        _
      %p804 = scmp.le.s32.totalorder 2, %s17
      // Predicated region
      $region49: #{tpu_custom_call.1} parent=5 // pred_check
        %p805 = pneg %p804
      $region50: #{tpu_custom_call.1} parent=5 // pred_check_branch
        %807 = sbr.rel (%p805) target = $region52
      $region51: #{tpu_custom_call.1} parent=5 // pred_region
        %s808 = ssub.s32 %s17, 2
        // Predicated region
        $region53: #{tpu_custom_call.1} parent=51 // pred_check
          %p809 = pneg %p177
        $region54: #{tpu_custom_call.1} parent=51 // pred_check_branch
          %811 = sbr.rel (%p809) target = $region56
        $region55: #{tpu_custom_call.1} parent=51 // pred_region
          %s812 = sand.u32 %s162, 1
          %s813 = scalar_lea.sflag [#allocation5], %s812
          %s814 = sand.u32 %s162, 1
          %s815 = smul.addr %s814, 256
          %s816 = scalar_lea.vmem [#allocation4], %s815
          %817 = dma.done %s813, 4096
        $region56: #{tpu_custom_call.1} parent=51 // pred_fallthru
          _
      $region52: #{tpu_custom_call.1} parent=5 // pred_fallthru
        _
    $region6: #{tpu_custom_call.1} parent=1 // loop_footer
      %s21 = sadd.s32 1, %s17
    $region7: #{tpu_custom_call.1} parent=1 // loop_footer_branch
      %16 = sbr.rel target = $region3
    $region8: #{tpu_custom_call.1} parent=1 // loop_exit
      _
    %818 = vsyncpa [#allocation5], 1
    %s819 = scalar_lea.sflag [#allocation5], 1
    %820 = vsyncpa %s819, 1

</llo_original>
